<compile_context>
chip_gen: v5e
topology: v5e:2x2
jax: 0.10.0
libtpu: 0.0.40
codegen_flags: <defaults>
</compile_context>

<pallas_src>
import math

import jax
import jax.numpy as jnp
from jax.experimental import pallas as pl
from jax.experimental.pallas import tpu as pltpu

_LANES = 128
_SUBLANES = 8


def make_positional_encoding_table(d_model: int, max_seq_len: int) -> jnp.ndarray:
    """Sinusoidal buffer, identical to the PyTorch __init__ (fp32, shape (1, L, D))."""
    position = jnp.arange(max_seq_len, dtype=jnp.float32)[:, None]            # (L, 1)
    div_term = jnp.exp(
        jnp.arange(0, d_model, 2, dtype=jnp.float32) * (-math.log(10000.0) / d_model)
    )                                                                          # (D/2,)
    angles = position * div_term                                               # (L, D/2)
    pe = jnp.zeros((max_seq_len, d_model), dtype=jnp.float32)
    pe = pe.at[:, 0::2].set(jnp.sin(angles))
    pe = pe.at[:, 1::2].set(jnp.cos(angles))
    return pe[None, :, :]                                                      # (1, L, D)


def _add_pe_kernel(x_ref, pe_ref, o_ref):
    # x_ref:  (BB, R, C) tile of x
    # pe_ref: (1,  R, C) matching tile of pe (broadcast over the batch dim)
    o_ref[...] = (x_ref[...] + pe_ref[...]).astype(o_ref.dtype)


def _cost(B, S, D, x_dtype, pe_dtype, out_dtype):
    n = B * S * D
    return pl.CostEstimate(
        flops=n,
        transcendentals=0,
        bytes_accessed=(n * jnp.dtype(x_dtype).itemsize
                        + n * jnp.dtype(out_dtype).itemsize
                        + S * D * jnp.dtype(pe_dtype).itemsize),
    )


_COMPILER_PARAMS = pltpu.CompilerParams(
    dimension_semantics=("parallel", "parallel"),
)


def _forward_dense(x, pe, out_dtype, target_tile_bytes):
    """Sublane+lane dense path: view (B, S, D) as (B, S*D//128, 128)."""
    B, S, D = x.shape
    L = pe.shape[1]
    n_rows = (S * D) // _LANES           # rows of the prefix this forward touches
    pe_rows = (L * D) // _LANES
    itemsize = max(jnp.dtype(x.dtype).itemsize,
                   jnp.dtype(pe.dtype).itemsize,
                   jnp.dtype(out_dtype).itemsize)

    # Contiguous row-major flatten: pure metadata, preserves elementwise mapping.
    x_view = x.reshape(B, n_rows, _LANES)
    pe_view = pe.reshape(1, pe_rows, _LANES)

    # ~target_tile_bytes per buffer: a multiple of 8 sublane-rows of 128 lanes.
    target_rows = max(
        _SUBLANES,
        (target_tile_bytes // (itemsize * _LANES)) // _SUBLANES * _SUBLANES,
    )

    if n_rows <= target_rows:
        # Whole per-batch payload fits in one tile; fold batch rows into the block.
        R = n_rows
        if R != pe_rows and R % _SUBLANES != 0:
            # Block row extent must be 8-aligned or equal the array's full extent;
            # for tiny sequences slice the (small) pe prefix once so both agree.
            pe_view = pe_view[:, :n_rows, :]
        BB = min(B, max(1, target_tile_bytes // max(1, R * _LANES * itemsize)))
    else:
        # Large sequence: tile rows. The full pe table is passed untouched — the
        # grid only ever addresses its S*D prefix, so no per-call slice/copy.
        R = min(target_rows, (n_rows // _SUBLANES) * _SUBLANES)
        BB = 1

    # Batch innermost (fastest-varying): pe block index constant across the inner
    # batch steps, so each pe tile is DMA'd once per row tile instead of B times.
    grid = (pl.cdiv(n_rows, R), pl.cdiv(B, BB))

    out = pl.pallas_call(
        _add_pe_kernel,
        out_shape=jax.ShapeDtypeStruct((B, n_rows, _LANES), out_dtype),
        grid_spec=pltpu.PrefetchScalarGridSpec(
            num_scalar_prefetch=0,
            grid=grid,
            in_specs=[
                pl.BlockSpec((BB, R, _LANES), lambda r, b: (b, r, 0)),   # x
                pl.BlockSpec((1, R, _LANES), lambda r, b: (0, r, 0)),    # pe (batch-broadcast)
            ],
            out_specs=pl.BlockSpec((BB, R, _LANES), lambda r, b: (b, r, 0)),
        ),
        compiler_params=_COMPILER_PARAMS,
        cost_estimate=_cost(B, S, D, x.dtype, pe.dtype, out_dtype),
    )(x_view, pe_view)
    return out.reshape(B, S, D)


def _forward_general(x, pe, out_dtype, target_tile_bytes):
    """Fallback for S*D not 128-aligned: tile (B, S, D) directly (full-D blocks)."""
    B, S, D = x.shape
    pe_slice = pe[:, :S, :]
    itemsize = max(jnp.dtype(x.dtype).itemsize,
                   jnp.dtype(pe.dtype).itemsize,
                   jnp.dtype(out_dtype).itemsize)
    row_bytes = D * itemsize
    target_rows = max(
        _SUBLANES,
        (target_tile_bytes // row_bytes) // _SUBLANES * _SUBLANES,
    )

    if S <= target_rows:
        TS = S                                           # full seq dim: always legal
        BB = min(B, max(1, target_tile_bytes // max(1, S * row_bytes)))
    else:
        TS = min(target_rows, (S // _SUBLANES) * _SUBLANES)
        BB = 1

    grid = (pl.cdiv(S, TS), pl.cdiv(B, BB))

    return pl.pallas_call(
        _add_pe_kernel,
        out_shape=jax.ShapeDtypeStruct((B, S, D), out_dtype),
        grid_spec=pltpu.PrefetchScalarGridSpec(
            num_scalar_prefetch=0,
            grid=grid,
            in_specs=[
                pl.BlockSpec((BB, TS, D), lambda s, b: (b, s, 0)),   # x
                pl.BlockSpec((1, TS, D), lambda s, b: (0, s, 0)),    # pe (batch-broadcast)
            ],
            out_specs=pl.BlockSpec((BB, TS, D), lambda s, b: (b, s, 0)),
        ),
        compiler_params=_COMPILER_PARAMS,
        cost_estimate=_cost(B, S, D, x.dtype, pe.dtype, out_dtype),
    )(x, pe_slice)


def positional_encoding(x: jnp.ndarray, pe: jnp.ndarray, *,
                        target_tile_bytes: int = 2 << 20) -> jnp.ndarray:
    """x: (B, S, D), pe: (1, max_seq_len, D) -> x + pe[:, :S, :]."""
    B, S, D = x.shape
    L = pe.shape[1]
    assert S <= L, "sequence length exceeds max_seq_len of the pe buffer"
    # PyTorch semantics: the fp32 buffer promotes the add (bf16 x -> fp32 out).
    out_dtype = jnp.result_type(x.dtype, pe.dtype)
    if (S * D) % _LANES == 0 and (L * D) % _LANES == 0:
        return _forward_dense(x, pe, out_dtype, target_tile_bytes)
    return _forward_general(x, pe, out_dtype, target_tile_bytes)


if __name__ == "__main__":
    # Primary (lane/sublane-dense) path.
    B, S, D = 2, 8, 32
    MAX_SEQ_LEN = 64

    key = jax.random.PRNGKey(0)
    x = jax.random.normal(key, (B, S, D), dtype=jnp.float32)
    pe = make_positional_encoding_table(D, MAX_SEQ_LEN)

    out = jax.block_until_ready(positional_encoding(x, pe))
    ref = x + pe[:, :S, :]
    assert out.shape == (B, S, D)
    assert out.dtype == ref.dtype
    assert jnp.allclose(out, ref, atol=1e-6), "dense path mismatch vs reference"

    # Non-128-aligned fallback path.
    B2, S2, D2 = 2, 5, 24
    x2 = jax.random.normal(jax.random.PRNGKey(0), (B2, S2, D2), dtype=jnp.float32)
    pe2 = make_positional_encoding_table(D2, 16)
    out2 = jax.block_until_ready(positional_encoding(x2, pe2))
    ref2 = x2 + pe2[:, :S2, :]
    assert jnp.allclose(out2, ref2, atol=1e-6), "fallback path mismatch vs reference"

    print("KERNEL_OK")
</pallas_src>

<mosaic_0001>
module attributes {stable_mosaic.version = 11 : i64} {
  func.func @_add_pe_kernel(%arg0: i32, %arg1: i32, %arg2: memref<2x2x128xf32, #tpu.memory_space<vmem>>, %arg3: memref<1x2x128xf32, #tpu.memory_space<vmem>>, %arg4: memref<2x2x128xf32, #tpu.memory_space<vmem>>) attributes {dimension_semantics = [#tpu.dimension_semantics<parallel>, #tpu.dimension_semantics<parallel>], iteration_bounds = array<i64: 1, 1>, scalar_prefetch = 0 : i64, scratch_operands = 0 : i64, tpu.core_type = #tpu.core_type<tc>, window_params = [{transform_indices = @transform_0, window_bounds = array<i64: 2, 2, 128>}, {transform_indices = @transform_1, window_bounds = array<i64: 1, 2, 128>}, {transform_indices = @transform_2, window_bounds = array<i64: 2, 2, 128>}]} {
    %c0 = arith.constant 0 : index
    %c0_0 = arith.constant 0 : index
    %c0_1 = arith.constant 0 : index
    %0 = vector.load %arg2[%c0, %c0_0, %c0_1] : memref<2x2x128xf32, #tpu.memory_space<vmem>>, vector<2x2x128xf32>
    %c0_2 = arith.constant 0 : index
    %c0_3 = arith.constant 0 : index
    %c0_4 = arith.constant 0 : index
    %1 = vector.load %arg3[%c0_2, %c0_3, %c0_4] : memref<1x2x128xf32, #tpu.memory_space<vmem>>, vector<1x2x128xf32>
    %2 = vector.broadcast %1 : vector<1x2x128xf32> to vector<2x2x128xf32>
    %3 = arith.addf %0, %2 : vector<2x2x128xf32>
    %c0_5 = arith.constant 0 : index
    %c0_6 = arith.constant 0 : index
    %c0_7 = arith.constant 0 : index
    %4 = vector.load %arg4[%c0_5, %c0_6, %c0_7] : memref<2x2x128xf32, #tpu.memory_space<vmem>>, vector<2x2x128xf32>
    tpu.vector_store %arg4[%c0_5, %c0_6, %c0_7], %3 {strides = array<i32>} : memref<2x2x128xf32, #tpu.memory_space<vmem>>, vector<2x2x128xf32>,
    return
  }
  func.func @transform_0(%arg0: i32, %arg1: i32) -> (i32, i32, i32) {
    %c0_i32 = arith.constant 0 : i32
    %c0_i32_0 = arith.constant 0 : i32
    return %arg1, %arg0, %c0_i32 : i32, i32, i32
  }
  func.func @transform_1(%arg0: i32, %arg1: i32) -> (i32, i32, i32) {
    %c0_i32 = arith.constant 0 : i32
    %c0_i32_0 = arith.constant 0 : i32
    %c0_i32_1 = arith.constant 0 : i32
    return %c0_i32, %arg0, %c0_i32_0 : i32, i32, i32
  }
  func.func @transform_2(%arg0: i32, %arg1: i32) -> (i32, i32, i32) {
    %c0_i32 = arith.constant 0 : i32
    %c0_i32_0 = arith.constant 0 : i32
    return %arg1, %arg0, %c0_i32 : i32, i32, i32
  }
}

</mosaic_0001>

<llo_original>
// kernel: tpu_custom_call.1
$region0: #{tpu_custom_call.1}
  #allocation0 [shape = 'u32[]', space=smem, size = 0x4, offset = 0x4, fixed_abs, tag = 'smem constant byte address 0x4 - core index']
  #allocation1 [shape = 'u32[72,128]{1,0:T(1,128)}', space=vmem, size = 0x9000, scoped, tag = 'internal scratch']
  %s0 = inlined_call_operand.hbm [shape: f32[2,2,128], index: 0, kind: input, shape index: {}]
  %s1 = inlined_call_operand.hbm [shape: f32[1,2,128], index: 1, kind: input, shape index: {}]
  %s2 = inlined_call_operand.hbm [shape: f32[2,2,128], index: 2, kind: output, shape index: {}]
  %s3 = sld [smem:[#allocation0]]
  $region26: #{tpu_custom_call.1} parent=0
    _
  %s5 = ssub.s32 1, %s3
  %s6 = scalar_select 0, %s5, %s3
  $region1: #{tpu_custom_call.1} parent=0
    #allocation2 [shape = 'u8[2048]{0}', space=vmem, size = 0x800, scoped, tag = 'input window, operand 0, single buffered']
    #allocation3 [shape = 's32[1]{0}', space=sflag, size = 0x4, scoped, tag = 'scoped memory for tpu_custom_call.1']
    #allocation4 [shape = 's32[1]{0}', space=sflag, size = 0x4, scoped, tag = 'scoped memory for tpu_custom_call.1']
    #allocation5 [shape = 'u8[1024]{0}', space=vmem, size = 0x400, scoped, tag = 'input window, operand 1, single buffered']
    #allocation6 [shape = 's32[1]{0}', space=sflag, size = 0x4, scoped, tag = 'scoped memory for tpu_custom_call.1']
    #allocation7 [shape = 'u8[2048]{0}', space=vmem, size = 0x800, scoped, tag = 'output window, operand 0, single buffered']
    %7 = vsyncpa [#allocation3], 0
    %8 = vsyncpa [#allocation6], 0
    %9 = vsyncpa [#allocation4], 0
    // Predicated region
    $region2: #{tpu_custom_call.1} parent=1 // pred_check
      _
    $region3: #{tpu_custom_call.1} parent=1 // pred_check_branch
      %11 = sbr.rel (0) target = $region5
    $region4: #{tpu_custom_call.1} parent=1 // pred_region
      %13 = vsyncadd [#allocation3], 0
      %s14 = sshll.u32 %s0, 4
      %s15 = int_to_ptr.hbm [resolvable:$true] %s14
      %s16 = sshll.u32 [#allocation2], 4
      %s17 = int_to_ptr.vmem [resolvable:$true] %s16
      %22 = dma.hbm_to_vmem [thread:$0]  %s15, 64, %s17, [#allocation3], 32, 32, 2
    $region5: #{tpu_custom_call.1} parent=1 // pred_fallthru
      _
    // Predicated region
    $region6: #{tpu_custom_call.1} parent=1 // pred_check
      _
    $region7: #{tpu_custom_call.1} parent=1 // pred_check_branch
      %24 = sbr.rel (0) target = $region9
    $region8: #{tpu_custom_call.1} parent=1 // pred_region
      %26 = vsyncadd [#allocation6], 0
      %s28 = sshll.u32 %s1, 4
      %s29 = int_to_ptr.hbm [resolvable:$true] %s28
      %s30 = sshll.u32 [#allocation5], 4
      %s31 = int_to_ptr.vmem [resolvable:$true] %s30
      %33 = dma.hbm_to_vmem [thread:$0]  %s29, 32, %s31, [#allocation6]
    $region9: #{tpu_custom_call.1} parent=1 // pred_fallthru
      _
    // Predicated region
    $region10: #{tpu_custom_call.1} parent=1 // pred_check
      _
    $region11: #{tpu_custom_call.1} parent=1 // pred_check_branch
      %35 = sbr.rel (0) target = $region13
    $region12: #{tpu_custom_call.1} parent=1 // pred_region
      %37 = dma.done [#allocation3], 64
    $region13: #{tpu_custom_call.1} parent=1 // pred_fallthru
      _
    // Predicated region
    $region14: #{tpu_custom_call.1} parent=1 // pred_check
      _
    $region15: #{tpu_custom_call.1} parent=1 // pred_check_branch
      %39 = sbr.rel (0) target = $region17
    $region16: #{tpu_custom_call.1} parent=1 // pred_region
      %41 = dma.done [#allocation6], 32
    $region17: #{tpu_custom_call.1} parent=1 // pred_fallthru
      _
    %v42 = vld [vmem:[#allocation2] sm:$0x3]
    %v43 = vld [vmem:[#allocation2 + $0x2] sm:$0x3]
    %v44 = vld [vmem:[#allocation5] sm:$0x3]
    %v45 = vadd.f32 %v42, %v44
    %v46 = vadd.f32 %v43, %v44
    %47 = vst [vmem:[#allocation7] sm:$0x3] %v45
    %48 = vst [vmem:[#allocation7 + $0x2] sm:$0x3] %v46
    // Predicated region
    $region18: #{tpu_custom_call.1} parent=1 // pred_check
      _
    $region19: #{tpu_custom_call.1} parent=1 // pred_check_branch
      %50 = sbr.rel (0) target = $region21
    $region20: #{tpu_custom_call.1} parent=1 // pred_region
      %52 = vsyncadd [#allocation4], 0
      %s53 = sshll.u32 [#allocation7], 4
      %s54 = int_to_ptr.vmem [resolvable:$true] %s53
      %s55 = sshll.u32 %s2, 4
      %s56 = int_to_ptr.hbm [resolvable:$true] %s55
      %61 = dma.vmem_to_hbm [thread:$0]  %s54, 64, %s56, [#allocation4], 32, 32, 2
    $region21: #{tpu_custom_call.1} parent=1 // pred_fallthru
      _
    // Predicated region
    $region22: #{tpu_custom_call.1} parent=1 // pred_check
      _
    $region23: #{tpu_custom_call.1} parent=1 // pred_check_branch
      %63 = sbr.rel (0) target = $region25
    $region24: #{tpu_custom_call.1} parent=1 // pred_region
      %65 = dma.done [#allocation4], 64
    $region25: #{tpu_custom_call.1} parent=1 // pred_fallthru
      _
    %66 = vsyncpa [#allocation3], 1
    %67 = vsyncpa [#allocation6], 1
    %68 = vsyncpa [#allocation4], 1

</llo_original>
